<compile_context>
chip_gen: v6e
topology: v6e:2x2x1
jax: 0.10.0
libtpu: 0.0.40
codegen_flags: <defaults>
</compile_context>

<pallas_src>
import functools

import jax
import jax.numpy as jnp
import numpy as np
from jax.experimental import pallas as pl
from jax.experimental.pallas import tpu as pltpu

# ---------------------------------------------------------------------------
# "cfg" constants (detectron2 defaults for ROI_HEADS)
# ---------------------------------------------------------------------------
NUM_CLASSES = 80
IOU_THRESHOLD = 0.5          # cfg.MODEL.ROI_HEADS.IOU_THRESHOLDS = [0.5]
BATCH_SIZE_PER_IMAGE = 64    # cfg.MODEL.ROI_HEADS.BATCH_SIZE_PER_IMAGE (small)
POSITIVE_FRACTION = 0.25     # cfg.MODEL.ROI_HEADS.POSITIVE_FRACTION

_LANE = 128
_SUBLANE = 8
_MAX_TILE_N = 1024           # lane-tile cap (v5e store slot / VALU friendly)
_TILE_ELEM_BUDGET = 65536    # target m_pad * tile_n (bounds vreg pressure)
_CLS_BITS = 8                # class packed into low 8 bits of the match key
_CLS_SHIFT = 1 << _CLS_BITS  # requires num_classes < 256


# ---------------------------------------------------------------------------
# Pallas kernel: pairwise IoU + Matcher + gt-class assignment, one (image,
# proposal-tile) grid step.
# ---------------------------------------------------------------------------
def _roi_match_kernel(num_classes, iou_thresh, with_iou, approx_recip,
                      gt_ref, prop_ref, *out_refs):
    # gt_ref:    (1, M, 8)   f32  [x0, y0, x1, y1, class, 0, 0, 0] per gt box
    # prop_ref:  (1, 4, TN)  f32  proposal coords, coordinate-major (lane dense)
    # out_refs:  [iou_ref (1, M, TN) bf16,]  packed_ref (1, 3, TN) i32
    #   packed rows: 0 = matched gt index, 1 = matcher label (0 bg / 1 fg),
    #                2 = per-proposal class label
    if with_iou:
        iou_ref, packed_ref = out_refs
    else:
        (packed_ref,) = out_refs

    gt = gt_ref[0]              # (M, 8)
    pr = prop_ref[0]            # (4, TN)

    m = gt.shape[0]
    tn = pr.shape[1]

    gx0 = gt[:, 0:1]            # (M, 1)
    gy0 = gt[:, 1:2]
    gx1 = gt[:, 2:3]
    gy1 = gt[:, 3:4]
    gtcls = gt[:, 4:5].astype(jnp.int32)     # (M, 1) class packed as float

    px0 = pr[0:1, :]            # (1, TN)  lane-dense, no relayout
    py0 = pr[1:2, :]
    px1 = pr[2:3, :]
    py1 = pr[3:4, :]

    area_gt = (gx1 - gx0) * (gy1 - gy0)      # (M, 1)
    area_pr = (px1 - px0) * (py1 - py0)      # (1, TN)

    iw = jnp.maximum(jnp.minimum(gx1, px1) - jnp.maximum(gx0, px0), 0.0)
    ih = jnp.maximum(jnp.minimum(gy1, py1) - jnp.maximum(gy0, py0), 0.0)
    inter = iw * ih                          # (M, TN)

    # union clamped away from 0 -> inter == 0 gives iou == 0 exactly, so no
    # extra (inter > 0) select is needed.
    union = jnp.maximum(area_gt + area_pr - inter, 1e-12)
    if approx_recip:
        iou = inter * pl.reciprocal(union, approx=True)   # EUP slot
    else:
        iou = inter / union                               # exact (bit-parity)

    if with_iou:
        iou_ref[0] = iou.astype(iou_ref.dtype)   # bf16 HBM writeback

    # Matcher: per-proposal max over the gt (sublane) axis.
    max_iou = jnp.max(iou, axis=0, keepdims=True)              # (1, TN)
    matched_lab = (max_iou >= iou_thresh).astype(jnp.int32)    # (1, TN)

    # Fused argmax-index + class gather: one min-select over a packed key
    # (idx * 256 + cls).  Ties resolve to the lowest gt index, matching
    # jnp.argmax / torch.max semantics.
    iota_m = jax.lax.broadcasted_iota(jnp.int32, (m, tn), 0)   # (M, TN)
    key = iota_m * _CLS_SHIFT + gtcls                          # (M, TN)
    big = jnp.int32(jnp.iinfo(jnp.int32).max)
    key_min = jnp.min(jnp.where(iou == max_iou, key, big),
                      axis=0, keepdims=True)                   # (1, TN)
    matched_idx = key_min >> _CLS_BITS
    cls_matched = key_min & (_CLS_SHIFT - 1)
    # matcher label 0 -> background class.  IOU_LABELS=[0,1] here, so no
    # -1 / ignore branch is needed.
    cls_out = jnp.where(matched_lab == 0, num_classes, cls_matched)

    # Pack the three int outputs into one (3, TN) store (single output DMA).
    rows = jax.lax.broadcasted_iota(jnp.int32, (3, tn), 0)
    packed_ref[0] = jnp.where(rows == 0, matched_idx,
                    jnp.where(rows == 1, matched_lab, cls_out))


def _round_up(x, k):
    return ((x + k - 1) // k) * k


# ---------------------------------------------------------------------------
# Wrapper: batched pairwise_iou + Matcher + class assignment
# ---------------------------------------------------------------------------
def roi_label_proposals(gt_boxes, proposal_boxes, gt_classes, *,
                        num_classes=NUM_CLASSES, iou_thresh=IOU_THRESHOLD,
                        tile_n=None, return_iou=False, approx_recip=True):
    """Batched pairwise IoU + Matcher + gt-class assignment.

    gt_boxes:        (B, M, 4) f32 XYXY
    proposal_boxes:  (B, N, 4) f32 XYXY
    gt_classes:      (B, M)    int
    Returns: packed (B, 3, N) i32 with rows
               0 = matched gt index, 1 = matcher label (0/1), 2 = class label
             [, iou (B, M, N) bf16 if return_iou]
    """
    assert num_classes < _CLS_SHIFT, "class id must fit in 8 bits"
    b, m, _ = gt_boxes.shape
    n = proposal_boxes.shape[1]

    if m == 0:
        # detectron2 has_gt=False branch: everything is labeled background.
        packed = jnp.concatenate([
            jnp.zeros((b, 2, n), jnp.int32),
            jnp.full((b, 1, n), num_classes, jnp.int32)], axis=1)
        if return_iou:
            return packed, jnp.zeros((b, 0, n), jnp.bfloat16)
        return packed

    # Pad gt axis to a sublane multiple; pad proposal axis to a lane multiple.
    m_pad = max(_round_up(m, _SUBLANE), _SUBLANE)
    n_pad = _round_up(n, _LANE)

    # Adaptive lane tile: bound m_pad * tile_n so the (M, TN) f32 temporaries
    # stay within the vreg file instead of spilling.
    if tile_n is None:
        tile_n = (_TILE_ELEM_BUDGET // m_pad) // _LANE * _LANE
        tile_n = max(_LANE, min(tile_n, _MAX_TILE_N, n_pad))
    # v7x: make sure there are >= 2 grid steps to shard across the 2 TCs.
    if b * pl.cdiv(n_pad, tile_n) < 2 and tile_n >= 2 * _LANE:
        tile_n = max(_LANE, (tile_n // 2) // _LANE * _LANE)
    n_pad = _round_up(n_pad, tile_n)

    # Padded gt boxes are degenerate (area 0 -> IoU 0; they can never win the
    # tie-broken min because their index is higher); padded proposals get
    # IoU 0 / background and are sliced off below.
    # gt slab: boxes in cols 0-3, class (as float) in col 4, cols 5-7 zero.
    gt_slab = jnp.concatenate(
        [gt_boxes.astype(jnp.float32),
         gt_classes.astype(jnp.float32)[..., None]], axis=-1)      # (B, M, 5)
    gt_slab = jnp.pad(gt_slab, ((0, 0), (0, m_pad - m), (0, 3)))    # (B, Mp, 8)

    # Proposals coordinate-major (B, 4, N_pad): lane-dense reads in the kernel.
    pr = jnp.swapaxes(proposal_boxes.astype(jnp.float32), 1, 2)
    if n_pad > n:
        pr = jnp.pad(pr, ((0, 0), (0, 0), (0, n_pad - n)))

    kernel = functools.partial(_roi_match_kernel, num_classes, iou_thresh,
                               return_iou, approx_recip)

    packed_shape = jax.ShapeDtypeStruct((b, 3, n_pad), jnp.int32)
    packed_spec = pl.BlockSpec((1, 3, tile_n), lambda i, j: (i, 0, j))
    if return_iou:
        iou_shape = jax.ShapeDtypeStruct((b, m_pad, n_pad), jnp.bfloat16)
        iou_spec = pl.BlockSpec((1, m_pad, tile_n), lambda i, j: (i, 0, j))
        out_shape = (iou_shape, packed_shape)
        out_specs = (iou_spec, packed_spec)
    else:
        out_shape = packed_shape
        out_specs = packed_spec

    # Explicit VMEM budget: double-buffered blocks + spill scratch for the
    # (m_pad, tile_n) f32 intermediates, capped at 32 MiB (v7x headroom).
    block_bytes = (m_pad * 8 + 4 * tile_n + 3 * tile_n) * 4
    scratch_bytes = 6 * m_pad * tile_n * 4
    if return_iou:
        block_bytes += m_pad * tile_n * 2
        scratch_bytes += 4 * m_pad * tile_n * 4
    vmem_limit = int(min(max(2 * block_bytes + scratch_bytes + (2 << 20),
                             8 << 20), 32 << 20))

    outs = pl.pallas_call(
        kernel,
        out_shape=out_shape,
        grid=(b, n_pad // tile_n),
        in_specs=[
            pl.BlockSpec((1, m_pad, 8), lambda i, j: (i, 0, 0)),     # gt slab
            pl.BlockSpec((1, 4, tile_n), lambda i, j: (i, 0, j)),    # proposals
        ],
        out_specs=out_specs,
        compiler_params=pltpu.CompilerParams(
            dimension_semantics=("parallel", "parallel"),
            vmem_limit_bytes=vmem_limit),
    )(gt_slab, pr)

    if return_iou:
        iou_pad, packed = outs
        return packed[:, :, :n], iou_pad[:, :m, :n]
    return outs[:, :, :n]


# ---------------------------------------------------------------------------
# Plain-JAX glue: deterministic fg/bg subsampling (subsample_labels semantics)
# ---------------------------------------------------------------------------
def sample_proposals(prop_gt_classes, key,
                     batch_size_per_image=BATCH_SIZE_PER_IMAGE,
                     positive_fraction=POSITIVE_FRACTION,
                     num_classes=NUM_CLASSES):
    # TODO(synk): exact subsample_labels has data-dependent fg/bg counts
    # (dynamic shapes); fixed fg/bg quotas with random top-k ranking match the
    # semantics whenever both pools are large enough (may return non-fg
    # fillers / duplicates otherwise).
    n = prop_gt_classes.shape[-1]
    num_fg = int(batch_size_per_image * positive_fraction)
    num_bg = batch_size_per_image - num_fg

    def _one(cls_row, k):
        is_fg = (cls_row != -1) & (cls_row != num_classes)
        is_bg = cls_row == num_classes
        rand = jax.random.uniform(k, (n,))
        _, fg_idx = jax.lax.top_k(jnp.where(is_fg, rand, -jnp.inf), num_fg)
        _, bg_idx = jax.lax.top_k(jnp.where(is_bg, rand, -jnp.inf), num_bg)
        idx = jnp.concatenate([fg_idx, bg_idx], axis=0)
        return idx, cls_row[idx]

    keys = jax.random.split(key, prop_gt_classes.shape[0])
    return jax.vmap(_one)(prop_gt_classes, keys)


# ---------------------------------------------------------------------------
# Pure-JAX reference (single image) for the correctness check
# ---------------------------------------------------------------------------
def _roi_match_ref(gt_boxes, prop_boxes, gt_classes,
                   num_classes=NUM_CLASSES, iou_thresh=IOU_THRESHOLD):
    g = gt_boxes[:, None, :]    # (M, 1, 4)
    p = prop_boxes[None, :, :]  # (1, N, 4)
    area_g = (g[..., 2] - g[..., 0]) * (g[..., 3] - g[..., 1])
    area_p = (p[..., 2] - p[..., 0]) * (p[..., 3] - p[..., 1])
    iw = jnp.maximum(jnp.minimum(g[..., 2], p[..., 2]) -
                     jnp.maximum(g[..., 0], p[..., 0]), 0.0)
    ih = jnp.maximum(jnp.minimum(g[..., 3], p[..., 3]) -
                     jnp.maximum(g[..., 1], p[..., 1]), 0.0)
    inter = iw * ih
    union = jnp.maximum(area_g + area_p - inter, 1e-12)
    iou = inter / union
    idx = jnp.argmax(iou, axis=0).astype(jnp.int32)
    lab = (jnp.max(iou, axis=0) >= iou_thresh).astype(jnp.int32)
    cls = jnp.where(lab == 0, num_classes, gt_classes[idx]).astype(jnp.int32)
    return iou, idx, lab, cls


def _make_boxes(key, shape, img_size=256.0):
    k1, k2, k3, k4 = jax.random.split(key, 4)
    x0 = jax.random.uniform(k1, shape, minval=0.0, maxval=img_size * 0.7)
    y0 = jax.random.uniform(k2, shape, minval=0.0, maxval=img_size * 0.7)
    w = jax.random.uniform(k3, shape, minval=8.0, maxval=img_size * 0.3)
    h = jax.random.uniform(k4, shape, minval=8.0, maxval=img_size * 0.3)
    return jnp.stack([x0, y0, x0 + w, y0 + h], axis=-1).astype(jnp.float32)


if __name__ == "__main__":
    key = jax.random.PRNGKey(0)
    B, M, N = 2, 10, 1000   # N / M intentionally not tile multiples (padding path)
    kg, kp, kc, ks = jax.random.split(key, 4)

    gt_boxes = _make_boxes(kg, (B, M))
    prop_boxes = _make_boxes(kp, (B, N))
    # make a few proposals overlap gt strongly so fg samples exist
    prop_boxes = prop_boxes.at[:, :M].set(gt_boxes + 2.0)
    gt_classes = jax.random.randint(kc, (B, M), 0, NUM_CLASSES, dtype=jnp.int32)

    # Exact-division path with bf16 IoU writeback: bit-exact vs. the reference
    # for the discrete outputs (matcher math stays f32).
    packed, iou = roi_label_proposals(
        gt_boxes, prop_boxes, gt_classes, return_iou=True, approx_recip=False)
    jax.block_until_ready((packed, iou))

    packed_np = np.asarray(packed)
    iou_np = np.asarray(jnp.asarray(iou, jnp.float32))
    all_ok = True
    for img in range(B):
        iou_r, idx_r, lab_r, cls_r = _roi_match_ref(
            gt_boxes[img], prop_boxes[img], gt_classes[img])
        ok = (np.allclose(iou_np[img], np.asarray(iou_r), atol=1e-2)  # bf16 storage
              and np.array_equal(packed_np[img, 0], np.asarray(idx_r))
              and np.array_equal(packed_np[img, 1], np.asarray(lab_r))
              and np.array_equal(packed_np[img, 2], np.asarray(cls_r)))
        all_ok &= ok

    # Production path: no IoU writeback, EUP approx reciprocal (not bit-checked
    # because ~1e-3 relative error can flip threshold-marginal labels).
    packed_prod = roi_label_proposals(gt_boxes, prop_boxes, gt_classes)
    jax.block_until_ready(packed_prod)

    # Random fg/bg subsampling (plain-JAX glue), per image.
    sampled_idx, sampled_cls = sample_proposals(packed_prod[:, 2, :], ks)
    jax.block_until_ready((sampled_idx, sampled_cls))

    print("KERNEL_OK" if all_ok else "KERNEL_MISMATCH")
</pallas_src>

<mosaic_0001>
module attributes {stable_mosaic.version = 11 : i64} {
  func.func @_roi_match_kernel(%arg0: i32, %arg1: i32, %arg2: memref<1x16x8xf32, #tpu.memory_space<vmem>>, %arg3: memref<1x4x1024xf32, #tpu.memory_space<vmem>>, %arg4: memref<1x16x1024xbf16, #tpu.memory_space<vmem>>, %arg5: memref<1x3x1024xi32, #tpu.memory_space<vmem>>) attributes {dimension_semantics = [#tpu.dimension_semantics<parallel>, #tpu.dimension_semantics<parallel>], iteration_bounds = array<i64: 2, 1>, scalar_prefetch = 0 : i64, scratch_operands = 0 : i64, tpu.core_type = #tpu.core_type<tc>, window_params = [{transform_indices = @transform_0, window_bounds = array<i64: 1, 16, 8>}, {transform_indices = @transform_1, window_bounds = array<i64: 1, 4, 1024>}, {transform_indices = @transform_2, window_bounds = array<i64: 1, 16, 1024>}, {transform_indices = @transform_3, window_bounds = array<i64: 1, 3, 1024>}]} {
    %c0 = arith.constant 0 : index
    %c0_0 = arith.constant 0 : index
    %c0_1 = arith.constant 0 : index
    %0 = vector.load %arg2[%c0, %c0_0, %c0_1] : memref<1x16x8xf32, #tpu.memory_space<vmem>>, vector<1x16x8xf32>
    %1 = vector.shape_cast %0 : vector<1x16x8xf32> to vector<16x8xf32>
    %c0_2 = arith.constant 0 : index
    %c0_3 = arith.constant 0 : index
    %c0_4 = arith.constant 0 : index
    %2 = vector.load %arg3[%c0_2, %c0_3, %c0_4] : memref<1x4x1024xf32, #tpu.memory_space<vmem>>, vector<1x4x1024xf32>
    %3 = vector.shape_cast %2 : vector<1x4x1024xf32> to vector<4x1024xf32>
    %4 = vector.extract_strided_slice %1 {offsets = [0, 0], sizes = [16, 1], strides = [1, 1]} : vector<16x8xf32> to vector<16x1xf32>
    %5 = vector.extract_strided_slice %1 {offsets = [0, 1], sizes = [16, 1], strides = [1, 1]} : vector<16x8xf32> to vector<16x1xf32>
    %6 = vector.extract_strided_slice %1 {offsets = [0, 2], sizes = [16, 1], strides = [1, 1]} : vector<16x8xf32> to vector<16x1xf32>
    %7 = vector.extract_strided_slice %1 {offsets = [0, 3], sizes = [16, 1], strides = [1, 1]} : vector<16x8xf32> to vector<16x1xf32>
    %8 = vector.extract_strided_slice %1 {offsets = [0, 4], sizes = [16, 1], strides = [1, 1]} : vector<16x8xf32> to vector<16x1xf32>
    %9 = arith.fptosi %8 : vector<16x1xf32> to vector<16x1xi32>
    %10 = vector.extract_strided_slice %3 {offsets = [0, 0], sizes = [1, 1024], strides = [1, 1]} : vector<4x1024xf32> to vector<1x1024xf32>
    %11 = vector.extract_strided_slice %3 {offsets = [1, 0], sizes = [1, 1024], strides = [1, 1]} : vector<4x1024xf32> to vector<1x1024xf32>
    %12 = vector.extract_strided_slice %3 {offsets = [2, 0], sizes = [1, 1024], strides = [1, 1]} : vector<4x1024xf32> to vector<1x1024xf32>
    %13 = vector.extract_strided_slice %3 {offsets = [3, 0], sizes = [1, 1024], strides = [1, 1]} : vector<4x1024xf32> to vector<1x1024xf32>
    %14 = arith.subf %6, %4 : vector<16x1xf32>
    %15 = arith.subf %7, %5 : vector<16x1xf32>
    %16 = arith.mulf %14, %15 : vector<16x1xf32>
    %17 = arith.subf %12, %10 : vector<1x1024xf32>
    %18 = arith.subf %13, %11 : vector<1x1024xf32>
    %19 = arith.mulf %17, %18 : vector<1x1024xf32>
    %20 = vector.broadcast %6 : vector<16x1xf32> to vector<16x1024xf32>
    %21 = vector.broadcast %12 : vector<1x1024xf32> to vector<16x1024xf32>
    %22 = arith.minimumf %20, %21 : vector<16x1024xf32>
    %23 = vector.broadcast %4 : vector<16x1xf32> to vector<16x1024xf32>
    %24 = vector.broadcast %10 : vector<1x1024xf32> to vector<16x1024xf32>
    %25 = arith.maximumf %23, %24 : vector<16x1024xf32>
    %26 = arith.subf %22, %25 : vector<16x1024xf32>
    %cst = arith.constant 0.000000e+00 : f32
    %27 = vector.broadcast %cst : f32 to vector<16x1024xf32>
    %28 = arith.maximumf %26, %27 : vector<16x1024xf32>
    %29 = vector.broadcast %7 : vector<16x1xf32> to vector<16x1024xf32>
    %30 = vector.broadcast %13 : vector<1x1024xf32> to vector<16x1024xf32>
    %31 = arith.minimumf %29, %30 : vector<16x1024xf32>
    %32 = vector.broadcast %5 : vector<16x1xf32> to vector<16x1024xf32>
    %33 = vector.broadcast %11 : vector<1x1024xf32> to vector<16x1024xf32>
    %34 = arith.maximumf %32, %33 : vector<16x1024xf32>
    %35 = arith.subf %31, %34 : vector<16x1024xf32>
    %cst_5 = arith.constant 0.000000e+00 : f32
    %36 = vector.broadcast %cst_5 : f32 to vector<16x1024xf32>
    %37 = arith.maximumf %35, %36 : vector<16x1024xf32>
    %38 = arith.mulf %28, %37 : vector<16x1024xf32>
    %39 = vector.broadcast %16 : vector<16x1xf32> to vector<16x1024xf32>
    %40 = vector.broadcast %19 : vector<1x1024xf32> to vector<16x1024xf32>
    %41 = arith.addf %39, %40 : vector<16x1024xf32>
    %42 = arith.subf %41, %38 : vector<16x1024xf32>
    %cst_6 = arith.constant 9.99999996E-13 : f32
    %43 = vector.broadcast %cst_6 : f32 to vector<16x1024xf32>
    %44 = arith.maximumf %42, %43 : vector<16x1024xf32>
    %45 = arith.divf %38, %44 : vector<16x1024xf32>
    %46 = arith.truncf %45 : vector<16x1024xf32> to vector<16x1024xbf16>
    %c0_7 = arith.constant 0 : index
    %c0_8 = arith.constant 0 : index
    %c0_9 = arith.constant 0 : index
    %47 = vector.load %arg4[%c0_7, %c0_8, %c0_9] : memref<1x16x1024xbf16, #tpu.memory_space<vmem>>, vector<1x16x1024xbf16>
    %48 = vector.shape_cast %47 : vector<1x16x1024xbf16> to vector<16x1024xbf16>
    %49 = vector.shape_cast %46 : vector<16x1024xbf16> to vector<1x16x1024xbf16>
    tpu.vector_store %arg4[%c0_7, %c0_8, %c0_9], %49 {strides = array<i32>} : memref<1x16x1024xbf16, #tpu.memory_space<vmem>>, vector<1x16x1024xbf16>,
    %cst_10 = arith.constant dense<0xFF800000> : vector<1024xf32>
    %50 = vector.multi_reduction <maximumf>, %45, %cst_10 [0] : vector<16x1024xf32> to vector<1024xf32>
    %51 = vector.shape_cast %50 : vector<1024xf32> to vector<1x1024xf32>
    %cst_11 = arith.constant 5.000000e-01 : f32
    %52 = vector.broadcast %cst_11 : f32 to vector<1x1024xf32>
    %53 = arith.cmpf oge, %51, %52 : vector<1x1024xf32>
    %54 = arith.extui %53 : vector<1x1024xi1> to vector<1x1024xi32>
    %55 = tpu.iota {dimensions = array<i32: 0>} : vector<16x1024xi32>
    %c256_i32 = arith.constant 256 : i32
    %56 = vector.broadcast %c256_i32 : i32 to vector<16x1024xi32>
    %57 = arith.muli %55, %56 : vector<16x1024xi32>
    %58 = vector.broadcast %9 : vector<16x1xi32> to vector<16x1024xi32>
    %59 = arith.addi %57, %58 : vector<16x1024xi32>
    %60 = vector.broadcast %51 : vector<1x1024xf32> to vector<16x1024xf32>
    %61 = arith.cmpf oeq, %45, %60 : vector<16x1024xf32>
    %c2147483647_i32 = arith.constant 2147483647 : i32
    %62 = vector.broadcast %c2147483647_i32 : i32 to vector<16x1024xi32>
    %63 = arith.select %61, %59, %62 : vector<16x1024xi1>, vector<16x1024xi32>
    %cst_12 = arith.constant dense<2147483647> : vector<1024xi32>
    %64 = vector.multi_reduction <minsi>, %63, %cst_12 [0] : vector<16x1024xi32> to vector<1024xi32>
    %65 = vector.shape_cast %64 : vector<1024xi32> to vector<1x1024xi32>
    %c8_i32 = arith.constant 8 : i32
    %66 = vector.broadcast %c8_i32 : i32 to vector<1x1024xi32>
    %67 = arith.shrsi %65, %66 : vector<1x1024xi32>
    %c255_i32 = arith.constant 255 : i32
    %68 = vector.broadcast %c255_i32 : i32 to vector<1x1024xi32>
    %69 = arith.andi %65, %68 : vector<1x1024xi32>
    %c0_i32 = arith.constant 0 : i32
    %70 = vector.broadcast %c0_i32 : i32 to vector<1x1024xi32>
    %71 = arith.cmpi eq, %54, %70 : vector<1x1024xi32>
    %c80_i32 = arith.constant 80 : i32
    %72 = vector.broadcast %c80_i32 : i32 to vector<1x1024xi32>
    %73 = arith.select %71, %72, %69 : vector<1x1024xi1>, vector<1x1024xi32>
    %74 = tpu.iota {dimensions = array<i32: 0>} : vector<3x1024xi32>
    %c0_i32_13 = arith.constant 0 : i32
    %75 = vector.broadcast %c0_i32_13 : i32 to vector<3x1024xi32>
    %76 = arith.cmpi eq, %74, %75 : vector<3x1024xi32>
    %c1_i32 = arith.constant 1 : i32
    %77 = vector.broadcast %c1_i32 : i32 to vector<3x1024xi32>
    %78 = arith.cmpi eq, %74, %77 : vector<3x1024xi32>
    %79 = vector.shape_cast %54 : vector<1x1024xi32> to vector<1x1024xi32>
    %80 = vector.broadcast %79 : vector<1x1024xi32> to vector<3x1024xi32>
    %81 = vector.shape_cast %73 : vector<1x1024xi32> to vector<1x1024xi32>
    %82 = vector.broadcast %81 : vector<1x1024xi32> to vector<3x1024xi32>
    %83 = arith.select %78, %80, %82 : vector<3x1024xi1>, vector<3x1024xi32>
    %84 = vector.shape_cast %67 : vector<1x1024xi32> to vector<1x1024xi32>
    %85 = vector.broadcast %84 : vector<1x1024xi32> to vector<3x1024xi32>
    %86 = arith.select %76, %85, %83 : vector<3x1024xi1>, vector<3x1024xi32>
    %c0_14 = arith.constant 0 : index
    %c0_15 = arith.constant 0 : index
    %c0_16 = arith.constant 0 : index
    %87 = vector.load %arg5[%c0_14, %c0_15, %c0_16] : memref<1x3x1024xi32, #tpu.memory_space<vmem>>, vector<1x3x1024xi32>
    %88 = vector.shape_cast %87 : vector<1x3x1024xi32> to vector<3x1024xi32>
    %89 = vector.shape_cast %86 : vector<3x1024xi32> to vector<1x3x1024xi32>
    tpu.vector_store %arg5[%c0_14, %c0_15, %c0_16], %89 {strides = array<i32>} : memref<1x3x1024xi32, #tpu.memory_space<vmem>>, vector<1x3x1024xi32>,
    return
  }
  func.func @transform_0(%arg0: i32, %arg1: i32) -> (i32, i32, i32) {
    %c0_i32 = arith.constant 0 : i32
    %c0_i32_0 = arith.constant 0 : i32
    %c0_i32_1 = arith.constant 0 : i32
    return %arg0, %c0_i32, %c0_i32_0 : i32, i32, i32
  }
  func.func @transform_1(%arg0: i32, %arg1: i32) -> (i32, i32, i32) {
    %c0_i32 = arith.constant 0 : i32
    %c0_i32_0 = arith.constant 0 : i32
    return %arg0, %c0_i32, %arg1 : i32, i32, i32
  }
  func.func @transform_2(%arg0: i32, %arg1: i32) -> (i32, i32, i32) {
    %c0_i32 = arith.constant 0 : i32
    %c0_i32_0 = arith.constant 0 : i32
    return %arg0, %c0_i32, %arg1 : i32, i32, i32
  }
  func.func @transform_3(%arg0: i32, %arg1: i32) -> (i32, i32, i32) {
    %c0_i32 = arith.constant 0 : i32
    %c0_i32_0 = arith.constant 0 : i32
    return %arg0, %c0_i32, %arg1 : i32, i32, i32
  }
}

</mosaic_0001>

<llo_original>
// kernel: tpu_custom_call.1
$region0: #{tpu_custom_call.1}
  #allocation0 [shape = 'u32[]', space=smem, size = 0x4, offset = 0x4, fixed_abs, tag = 'smem constant byte address 0x4 - core index']
  #allocation1 [shape = 'u32[144,128]{1,0:T(1,128)}', space=vmem, size = 0x12000, scoped, tag = 'internal scratch']
  %s0 = inlined_call_operand.vmem [shape: f32[2,16,8], index: 0, kind: input, shape index: {}]
  %s1 = inlined_call_operand.hbm [shape: f32[2,4,1024], index: 1, kind: input, shape index: {}]
  %s2 = inlined_call_operand.hbm [shape: bf16[2,16,1024], index: 2, kind: output, shape index: {0}]
  %s3 = inlined_call_operand.vmem [shape: s32[2,3,1024], index: 3, kind: output, shape index: {1}]
  %4 = xla_tuple %s2, %s3
  %s5 = sld [smem:[#allocation0]]
  $region53: #{tpu_custom_call.1} parent=0
    _
  %s7 = ssub.s32 1, %s5
  %s8 = scalar_select 0, %s7, %s5
  $region1: #{tpu_custom_call.1} parent=0
    #allocation2 [shape = 'u8[32768]{0}', space=vmem, size = 0x8000, scoped, tag = 'input window, operand 1']
    #allocation3 [shape = 's32[2]{0}', space=sflag, size = 0x8, scoped, tag = 'scoped memory for tpu_custom_call.1']
    #allocation4 [shape = 's32[2]{0}', space=sflag, size = 0x8, scoped, tag = 'scoped memory for tpu_custom_call.1']
    #allocation5 [shape = 'u8[65536]{0}', space=vmem, size = 0x10000, scoped, tag = 'output window, operand 0']
    %9 = vsyncpa [#allocation3], 0
    %s10 = scalar_lea.sflag [#allocation3], 1
    %11 = vsyncpa %s10, 0
    %12 = vsyncpa [#allocation4], 0
    %s13 = scalar_lea.sflag [#allocation4], 1
    %14 = vsyncpa %s13, 0
    loop: start=0, step=1, limit=4
    $region2: #{tpu_custom_call.1} parent=1 // loop_pre_header
      _
    $region3: #{tpu_custom_call.1} parent=1 // loop_header
      %s16 = sphi 0, %s20
      %p17 = scmp.ge.s32.totalorder %s16, 4
      %s23 = sphi 0, %s35
      %s24 = sphi 0, %s31
      %s25 = sphi 0, %s23
      %s26 = sphi 0, %s24
      %s27 = sphi 0, %s25
      %s28 = sphi 0, %s26
      %s38 = sphi 0, %s40
      %s41 = sphi 0, %s38
      %s42 = sphi 0, %s41
      %s58 = sphi 0, %s42
      %s66 = sphi 0, %s68
      %s69 = sphi 0, %s66
      %s70 = sphi 0, %s69
      %s86 = sphi 0, %s70
      %s94 = sphi 0, %s96
      %s97 = sphi 0, %s94
      %s98 = sphi 0, %s97
      %s114 = sphi 0, %s98
      %s122 = sphi 0, %s124
      %s125 = sphi 0, %s122
      %s126 = sphi 0, %s125
      %s142 = sphi 0, %s126
    $region4: #{tpu_custom_call.1} parent=1 // loop_header_branch
      %19 = sbr.rel (%p17) target = $region8
    $region5: #{tpu_custom_call.1} parent=1 // loop_body
      %s21 = ssub.s32 %s16, 1
      %s22 = ssub.s32 %s16, 2
      %s29 = sadd.s32 1, %s24
      %p30 = scmp.ge.s32.totalorder %s29, 1
      %s31 = scalar_select %p30, 0, %s29
      %s32 = sadd.s32 1, %s23
      %s33 = scalar_select %p30, %s32, %s23
      %p34 = scmp.ge.s32.totalorder %s33, 2
      %s35 = scalar_select %p34, 0, %s33
      %s36 = ssub.s32 %s23, %s35
      %p37 = scmp.eq.s32.totalorder %s36, 0
      %s39 = sadd.s32 %s38, 1
      %s40 = scalar_select %p37, %s38, %s39
      %p43 = pneg %p37
      %p44 = scmp.eq.s32.totalorder %s16, 1
      %p45 = por %p43, %p44
      %p46 = scmp.ne.s32.totalorder %s38, %s41
      %p47 = scmp.eq.s32.totalorder %s16, 0
      %p48 = por %p46, %p47
      %p49 = scmp.ne.s32.totalorder %s38, %s41
      %p50 = scmp.eq.s32.totalorder %s21, 1
      %p51 = por %p49, %p50
      %p52 = scmp.ne.s32.totalorder %s41, %s42
      %p53 = scmp.eq.s32.totalorder %s21, 0
      %p54 = por %p52, %p53
      %p55 = scmp.ne.s32.totalorder %s41, %s42
      %p56 = scmp.eq.s32.totalorder %s22, 1
      %p57 = por %p55, %p56
      %p59 = scmp.ne.s32.totalorder %s42, %s58
      %p60 = scmp.eq.s32.totalorder %s22, 0
      %p61 = por %p59, %p60
      %s62 = ssub.s32 %s23, %s35
      %s63 = ssub.s32 %s24, %s31
      %s64 = sor.u32 %s62, %s63
      %p65 = scmp.eq.s32.totalorder %s64, 0
      %s67 = sadd.s32 %s66, 1
      %s68 = scalar_select %p65, %s66, %s67
      %p71 = pneg %p65
      %p72 = scmp.eq.s32.totalorder %s16, 1
      %p73 = por %p71, %p72
      %p74 = scmp.ne.s32.totalorder %s66, %s69
      %p75 = scmp.eq.s32.totalorder %s16, 0
      %p76 = por %p74, %p75
      %p77 = scmp.ne.s32.totalorder %s66, %s69
      %p78 = scmp.eq.s32.totalorder %s21, 1
      %p79 = por %p77, %p78
      %p80 = scmp.ne.s32.totalorder %s69, %s70
      %p81 = scmp.eq.s32.totalorder %s21, 0
      %p82 = por %p80, %p81
      %p83 = scmp.ne.s32.totalorder %s69, %s70
      %p84 = scmp.eq.s32.totalorder %s22, 1
      %p85 = por %p83, %p84
      %p87 = scmp.ne.s32.totalorder %s70, %s86
      %p88 = scmp.eq.s32.totalorder %s22, 0
      %p89 = por %p87, %p88
      %s90 = ssub.s32 %s23, %s35
      %s91 = ssub.s32 %s24, %s31
      %s92 = sor.u32 %s90, %s91
      %p93 = scmp.eq.s32.totalorder %s92, 0
      %s95 = sadd.s32 %s94, 1
      %s96 = scalar_select %p93, %s94, %s95
      %p99 = pneg %p93
      %p100 = scmp.eq.s32.totalorder %s16, 1
      %p101 = por %p99, %p100
      %p102 = scmp.ne.s32.totalorder %s94, %s97
      %p103 = scmp.eq.s32.totalorder %s16, 0
      %p104 = por %p102, %p103
      %p105 = scmp.ne.s32.totalorder %s94, %s97
      %p106 = scmp.eq.s32.totalorder %s21, 1
      %p107 = por %p105, %p106
      %p108 = scmp.ne.s32.totalorder %s97, %s98
      %p109 = scmp.eq.s32.totalorder %s21, 0
      %p110 = por %p108, %p109
      %p111 = scmp.ne.s32.totalorder %s97, %s98
      %p112 = scmp.eq.s32.totalorder %s22, 1
      %p113 = por %p111, %p112
      %p115 = scmp.ne.s32.totalorder %s98, %s114
      %p116 = scmp.eq.s32.totalorder %s22, 0
      %p117 = por %p115, %p116
      %s118 = ssub.s32 %s23, %s35
      %s119 = ssub.s32 %s24, %s31
      %s120 = sor.u32 %s118, %s119
      %p121 = scmp.eq.s32.totalorder %s120, 0
      %s123 = sadd.s32 %s122, 1
      %s124 = scalar_select %p121, %s122, %s123
      %p127 = pneg %p121
      %p128 = scmp.eq.s32.totalorder %s16, 1
      %p129 = por %p127, %p128
      %p130 = scmp.ne.s32.totalorder %s122, %s125
      %p131 = scmp.eq.s32.totalorder %s16, 0
      %p132 = por %p130, %p131
      %p133 = scmp.ne.s32.totalorder %s122, %s125
      %p134 = scmp.eq.s32.totalorder %s21, 1
      %p135 = por %p133, %p134
      %p136 = scmp.ne.s32.totalorder %s125, %s126
      %p137 = scmp.eq.s32.totalorder %s21, 0
      %p138 = por %p136, %p137
      %p139 = scmp.ne.s32.totalorder %s125, %s126
      %p140 = scmp.eq.s32.totalorder %s22, 1
      %p141 = por %p139, %p140
      %p143 = scmp.ne.s32.totalorder %s126, %s142
      %p144 = scmp.eq.s32.totalorder %s22, 0
      %p145 = por %p143, %p144
      %p146 = scmp.le.s32.totalorder 1, %s16
      %p147 = scmp.lt.s32.totalorder %s16, 3
      %p148 = pnand %p146, %p147
      %p149 = pneg %p148
      // Predicated region
      $region9: #{tpu_custom_call.1} parent=5 // pred_check
        _
      $region10: #{tpu_custom_call.1} parent=5 // pred_check_branch
        %151 = sbr.rel (%p148) target = $region12
      $region11: #{tpu_custom_call.1} parent=5 // pred_region
        %s152 = ssub.s32 %s16, 1
      $region12: #{tpu_custom_call.1} parent=5 // pred_fallthru
        _
      %p153 = scmp.lt.s32.totalorder %s16, 2
      // Predicated region
      $region13: #{tpu_custom_call.1} parent=5 // pred_check
        %p154 = pneg %p153
      $region14: #{tpu_custom_call.1} parent=5 // pred_check_branch
        %156 = sbr.rel (%p154) target = $region16
      $region15: #{tpu_custom_call.1} parent=5 // pred_region
        // Predicated region
        $region17: #{tpu_custom_call.1} parent=15 // pred_check
          %p157 = pneg %p48
        $region18: #{tpu_custom_call.1} parent=15 // pred_check_branch
          %159 = sbr.rel (%p157) target = $region20
        $region19: #{tpu_custom_call.1} parent=15 // pred_region
          %p160 = scmp.lt.s32.totalorder %s23, 1
          %s161 = scalar_select %p160, %s23, 1
          %s162 = smul.addr %s161, 2
          %s163 = smul.addr %s162, 8
          %s164 = scalar_lea.vmem %s0, %s163
        $region20: #{tpu_custom_call.1} parent=15 // pred_fallthru
          _
        // Predicated region
        $region21: #{tpu_custom_call.1} parent=15 // pred_check
          %p165 = pneg %p76
        $region22: #{tpu_custom_call.1} parent=15 // pred_check_branch
          %167 = sbr.rel (%p165) target = $region24
        $region23: #{tpu_custom_call.1} parent=15 // pred_region
          %s168 = sand.u32 %s66, 1
          %s169 = scalar_lea.sflag [#allocation3], %s168
          %s170 = sand.u32 %s66, 1
          %s171 = smul.addr %s170, 32
          %s172 = scalar_lea.vmem [#allocation2], %s171
          %s173 = smul.u32 8, %s24
          %s175 = ssub.s32 512, 512
          %176 = vsyncadd %s169, %s175
          %s177 = smul.addr %s23, 8
          %s178 = sadd.s32 %s173, %s177
          %s179 = smul.addr %s178, 64
          %s180 = scalar_lea.hbm %s1, %s179
          %s182 = sshll.u32 %s172, 4
          %s183 = int_to_ptr.vmem [resolvable:$true] %s182
          %185 = dma.hbm_to_vmem [thread:$0]  %s180, 512, %s183, %s169
        $region24: #{tpu_custom_call.1} parent=15 // pred_fallthru
          _
      $region16: #{tpu_custom_call.1} parent=5 // pred_fallthru
        _
      %p186 = scmp.le.s32.totalorder 1, %s16
      %p187 = scmp.lt.s32.totalorder %s16, 3
      %p188 = pnand %p186, %p187
      %p189 = pneg %p188
      // Predicated region
      $region25: #{tpu_custom_call.1} parent=5 // pred_check
        _
      $region26: #{tpu_custom_call.1} parent=5 // pred_check_branch
        %191 = sbr.rel (%p188) target = $region28
      $region27: #{tpu_custom_call.1} parent=5 // pred_region
        %s192 = ssub.s32 %s16, 1
        %s193 = sand.u32 %s69, 1
        %s194 = scalar_lea.sflag [#allocation3], %s193
        %s195 = sand.u32 %s69, 1
        %s196 = smul.addr %s195, 32
        %s197 = scalar_lea.vmem [#allocation2], %s196
        // Predicated region
        $region29: #{tpu_custom_call.1} parent=27 // pred_check
          %p198 = pneg %p82
        $region30: #{tpu_custom_call.1} parent=27 // pred_check_branch
          %200 = sbr.rel (%p198) target = $region32
        $region31: #{tpu_custom_call.1} parent=27 // pred_region
          %201 = dma.done %s194, 512
        $region32: #{tpu_custom_call.1} parent=27 // pred_fallthru
          _
        %p202 = scmp.lt.s32.totalorder %s25, 1
        %s203 = scalar_select %p202, %s25, 1
        %s204 = smul.addr %s203, 2
        %s205 = smul.addr %s204, 8
        %s206 = scalar_lea.vmem %s0, %s205
        %p207 = pneg %p54
        %p208 = pneg %p51
        %s209 = sand.u32 %s69, 1
        %s210 = scalar_lea.sflag [#allocation3], %s209
        %s211 = sand.u32 %s69, 1
        %s212 = smul.addr %s211, 32
        %s213 = scalar_lea.vmem [#allocation2], %s212
        %p214 = pneg %p82
        %p215 = pneg %p79
        %p216 = pneg %p110
        %p217 = pneg %p107
        %s218 = sand.u32 %s97, 1
        %s219 = scalar_lea.sflag [#allocation4], %s218
        %s220 = sand.u32 %s97, 1
        %s221 = smul.addr %s220, 64
        %s222 = scalar_lea.vmem [#allocation5], %s221
        %p223 = pneg %p138
        %p224 = pneg %p135
        %s225 = smul.u32 8, %s26
        %p226 = scmp.lt.s32.totalorder %s25, 1
        %s227 = scalar_select %p226, %s25, 1
        %p228 = scmp.lt.s32.totalorder %s225, 7
        %s229 = scalar_select %p228, %s225, 7
        %s230 = smul.addr %s227, 8
        %s231 = sadd.s32 %s229, %s230
        %s232 = smul.addr %s231, 4
        %s233 = scalar_lea.vmem %s3, %s232
        %p234 = scmp.lt.s32.totalorder %s25, 1
        %s235 = scalar_select %p234, %s25, 1
        %s236 = smul.addr %s235, 2
        %s237 = smul.addr %s236, 8
        %s238 = scalar_lea.vmem %s0, %s237
        %s239 = smul.u32 8, %s26
        %s240 = smul.u32 8, %s26
        %s241 = smul.u32 8, %s26
        %p242 = scmp.lt.s32.totalorder %s25, 1
        %s243 = scalar_select %p242, %s25, 1
        %p244 = scmp.lt.s32.totalorder %s241, 7
        %s245 = scalar_select %p244, %s241, 7
        %s246 = smul.addr %s243, 8
        %s247 = sadd.s32 %s245, %s246
        %s248 = smul.addr %s247, 4
        %s249 = scalar_lea.vmem %s3, %s248
        %s250 = smul.u32 8, %s26
        %v251 = vld [vmem:[%s238] sm:$0xff]
        %v252 = vld [vmem:[%s238 + $0x8] sm:$0xff]
        %v253 = vld [vmem:[%s197] sm:$0xff]
        %v254 = vld [vmem:[%s197 + $0x8] sm:$0xff]
        %v255 = vld [vmem:[%s197 + $0x10] sm:$0xff]
        %v256 = vld [vmem:[%s197 + $0x18] sm:$0xff]
        %v257 = vcvt.f32.s32.to.zero.pseudo %v251
        %v258 = vcvt.f32.s32.to.zero.pseudo %v252
        %261 = vrot.lane.b32.xlu0 %v251, 2
        %v262 = vpop.permute.xlu0 %261
        %263 = vrot.lane.b32.xlu0 %v252, 2
        %v264 = vpop.permute.xlu0 %263
        %v267 = vsub.f32 %v251, %v262
        %v268 = vsub.f32 %v252, %v264
        %271 = vrot.lane.b32.xlu0 %v267, 127
        %v272 = vpop.permute.xlu0 %271
        %273 = vrot.lane.b32.xlu0 %v268, 127
        %v274 = vpop.permute.xlu0 %273
        %v277 = vmul.f32 %v267, %v272
        %v278 = vmul.f32 %v268, %v274
        %v283 = vrot.slane %v253, 6
        %v284 = vrot.slane %v254, 6
        %v285 = vrot.slane %v255, 6
        %v286 = vrot.slane %v256, 6
        %v291 = vsub.f32 %v253, %v283
        %v292 = vsub.f32 %v254, %v284
        %v293 = vsub.f32 %v255, %v285
        %v294 = vsub.f32 %v256, %v286
        %v299 = vrot.slane %v291, 5
        %v300 = vrot.slane %v299, 4
        %v301 = vrot.slane %v292, 5
        %v302 = vrot.slane %v301, 4
        %v303 = vrot.slane %v293, 5
        %v304 = vrot.slane %v303, 4
        %v305 = vrot.slane %v294, 5
        %v306 = vrot.slane %v305, 4
        %v311 = vmul.f32 %v291, %v300
        %v312 = vmul.f32 %v292, %v302
        %v313 = vmul.f32 %v293, %v304
        %v314 = vmul.f32 %v294, %v306
        %315 = vset.pattern.permute.xlu0 2
        %316 = vperm.xlu0 %315, %v251
        %v317 = vpop.permute.xlu0 %316
        %319 = vset.pattern.permute.xlu0 2
        %320 = vperm.xlu0 %319, %v252
        %v321 = vpop.permute.xlu0 %320
        %v323 = vlaneseq
        %v324 = vshrl.u32 %v323, 7
        %v325 = vsub.s32 2, %v324
        %v326 = vrot.slane %v253, %v325
        %v327 = vlaneseq
        %v328 = vshrl.u32 %v327, 7
        %v329 = vsub.s32 6, %v328
        %v330 = vrot.slane %v253, %v329
        %v331 = vlaneseq
        %v332 = vshrl.u32 %v331, 7
        %v333 = vsub.s32 2, %v332
        %v334 = vrot.slane %v254, %v333
        %v335 = vlaneseq
        %v336 = vshrl.u32 %v335, 7
        %v337 = vsub.s32 6, %v336
        %v338 = vrot.slane %v254, %v337
        %v339 = vlaneseq
        %v340 = vshrl.u32 %v339, 7
        %v341 = vsub.s32 2, %v340
        %v342 = vrot.slane %v255, %v341
        %v343 = vlaneseq
        %v344 = vshrl.u32 %v343, 7
        %v345 = vsub.s32 6, %v344
        %v346 = vrot.slane %v255, %v345
        %v347 = vlaneseq
        %v348 = vshrl.u32 %v347, 7
        %v349 = vsub.s32 2, %v348
        %v350 = vrot.slane %v256, %v349
        %v351 = vlaneseq
        %v352 = vshrl.u32 %v351, 7
        %v353 = vsub.s32 6, %v352
        %v354 = vrot.slane %v256, %v353
        %v363 = vlaneseq
        %v364 = vshrl.u32 %v363, 7
        %v365 = vsub.s32 2, %v364
        %v366 = vrot.slane %v326, %v365
        %v367 = vlaneseq
        %v368 = vshrl.u32 %v367, 7
        %v369 = vsub.s32 2, %v368
        %v370 = vrot.slane %v330, %v369
        %v371 = vlaneseq
        %v372 = vshrl.u32 %v371, 7
        %v373 = vsub.s32 2, %v372
        %v374 = vrot.slane %v334, %v373
        %v375 = vlaneseq
        %v376 = vshrl.u32 %v375, 7
        %v377 = vsub.s32 2, %v376
        %v378 = vrot.slane %v338, %v377
        %v379 = vlaneseq
        %v380 = vshrl.u32 %v379, 7
        %v381 = vsub.s32 2, %v380
        %v382 = vrot.slane %v342, %v381
        %v383 = vlaneseq
        %v384 = vshrl.u32 %v383, 7
        %v385 = vsub.s32 2, %v384
        %v386 = vrot.slane %v346, %v385
        %v387 = vlaneseq
        %v388 = vshrl.u32 %v387, 7
        %v389 = vsub.s32 2, %v388
        %v390 = vrot.slane %v350, %v389
        %v391 = vlaneseq
        %v392 = vshrl.u32 %v391, 7
        %v393 = vsub.s32 2, %v392
        %v394 = vrot.slane %v354, %v393
        %v395 = vmin.f32 %v317, %v366
        %v396 = vmin.f32 %v317, %v370
        %v397 = vmin.f32 %v317, %v374
        %v398 = vmin.f32 %v317, %v378
        %v399 = vmin.f32 %v317, %v382
        %v400 = vmin.f32 %v317, %v386
        %v401 = vmin.f32 %v317, %v390
        %v402 = vmin.f32 %v317, %v394
        %v403 = vmin.f32 %v321, %v366
        %v404 = vmin.f32 %v321, %v370
        %v405 = vmin.f32 %v321, %v374
        %v406 = vmin.f32 %v321, %v378
        %v407 = vmin.f32 %v321, %v382
        %v408 = vmin.f32 %v321, %v386
        %v409 = vmin.f32 %v321, %v390
        %v410 = vmin.f32 %v321, %v394
        %411 = vset.pattern.permute.xlu0 0
        %412 = vperm.xlu0 %411, %v251
        %v413 = vpop.permute.xlu0 %412
        %415 = vset.pattern.permute.xlu0 0
        %416 = vperm.xlu0 %415, %v252
        %v417 = vpop.permute.xlu0 %416
        %v419 = vlaneseq
        %v420 = vshrl.u32 %v419, 7
        %v421 = vsub.s32 0, %v420
        %v422 = vrot.slane %v253, %v421
        %v423 = vlaneseq
        %v424 = vshrl.u32 %v423, 7
        %v425 = vsub.s32 4, %v424
        %v426 = vrot.slane %v253, %v425
        %v427 = vlaneseq
        %v428 = vshrl.u32 %v427, 7
        %v429 = vsub.s32 0, %v428
        %v430 = vrot.slane %v254, %v429
        %v431 = vlaneseq
        %v432 = vshrl.u32 %v431, 7
        %v433 = vsub.s32 4, %v432
        %v434 = vrot.slane %v254, %v433
        %v435 = vlaneseq
        %v436 = vshrl.u32 %v435, 7
        %v437 = vsub.s32 0, %v436
        %v438 = vrot.slane %v255, %v437
        %v439 = vlaneseq
        %v440 = vshrl.u32 %v439, 7
        %v441 = vsub.s32 4, %v440
        %v442 = vrot.slane %v255, %v441
        %v443 = vlaneseq
        %v444 = vshrl.u32 %v443, 7
        %v445 = vsub.s32 0, %v444
        %v446 = vrot.slane %v256, %v445
        %v447 = vlaneseq
        %v448 = vshrl.u32 %v447, 7
        %v449 = vsub.s32 4, %v448
        %v450 = vrot.slane %v256, %v449
        %v459 = vlaneseq
        %v460 = vshrl.u32 %v459, 7
        %v461 = vsub.s32 0, %v460
        %v462 = vrot.slane %v422, %v461
        %v463 = vlaneseq
        %v464 = vshrl.u32 %v463, 7
        %v465 = vsub.s32 0, %v464
        %v466 = vrot.slane %v426, %v465
        %v467 = vlaneseq
        %v468 = vshrl.u32 %v467, 7
        %v469 = vsub.s32 0, %v468
        %v470 = vrot.slane %v430, %v469
        %v471 = vlaneseq
        %v472 = vshrl.u32 %v471, 7
        %v473 = vsub.s32 0, %v472
        %v474 = vrot.slane %v434, %v473
        %v475 = vlaneseq
        %v476 = vshrl.u32 %v475, 7
        %v477 = vsub.s32 0, %v476
        %v478 = vrot.slane %v438, %v477
        %v479 = vlaneseq
        %v480 = vshrl.u32 %v479, 7
        %v481 = vsub.s32 0, %v480
        %v482 = vrot.slane %v442, %v481
        %v483 = vlaneseq
        %v484 = vshrl.u32 %v483, 7
        %v485 = vsub.s32 0, %v484
        %v486 = vrot.slane %v446, %v485
        %v487 = vlaneseq
        %v488 = vshrl.u32 %v487, 7
        %v489 = vsub.s32 0, %v488
        %v490 = vrot.slane %v450, %v489
        %v491 = vmax.f32 %v413, %v462
        %v492 = vmax.f32 %v413, %v466
        %v493 = vmax.f32 %v413, %v470
        %v494 = vmax.f32 %v413, %v474
        %v495 = vmax.f32 %v413, %v478
        %v496 = vmax.f32 %v413, %v482
        %v497 = vmax.f32 %v413, %v486
        %v498 = vmax.f32 %v413, %v490
        %v499 = vmax.f32 %v417, %v462
        %v500 = vmax.f32 %v417, %v466
        %v501 = vmax.f32 %v417, %v470
        %v502 = vmax.f32 %v417, %v474
        %v503 = vmax.f32 %v417, %v478
        %v504 = vmax.f32 %v417, %v482
        %v505 = vmax.f32 %v417, %v486
        %v506 = vmax.f32 %v417, %v490
        %v507 = vsub.f32 %v395, %v491
        %v508 = vsub.f32 %v396, %v492
        %v509 = vsub.f32 %v397, %v493
        %v510 = vsub.f32 %v398, %v494
        %v511 = vsub.f32 %v399, %v495
        %v512 = vsub.f32 %v400, %v496
        %v513 = vsub.f32 %v401, %v497
        %v514 = vsub.f32 %v402, %v498
        %v515 = vsub.f32 %v403, %v499
        %v516 = vsub.f32 %v404, %v500
        %v517 = vsub.f32 %v405, %v501
        %v518 = vsub.f32 %v406, %v502
        %v519 = vsub.f32 %v407, %v503
        %v520 = vsub.f32 %v408, %v504
        %v521 = vsub.f32 %v409, %v505
        %v522 = vsub.f32 %v410, %v506
        %v523 = vmax.f32 %v507, 0.0
        %v524 = vmax.f32 %v508, 0.0
        %v525 = vmax.f32 %v509, 0.0
        %v526 = vmax.f32 %v510, 0.0
        %v527 = vmax.f32 %v511, 0.0
        %v528 = vmax.f32 %v512, 0.0
        %v529 = vmax.f32 %v513, 0.0
        %v530 = vmax.f32 %v514, 0.0
        %v531 = vmax.f32 %v515, 0.0
        %v532 = vmax.f32 %v516, 0.0
        %v533 = vmax.f32 %v517, 0.0
        %v534 = vmax.f32 %v518, 0.0
        %v535 = vmax.f32 %v519, 0.0
        %v536 = vmax.f32 %v520, 0.0
        %v537 = vmax.f32 %v521, 0.0
        %v538 = vmax.f32 %v522, 0.0
        %539 = vset.pattern.permute.xlu0 3
        %540 = vperm.xlu0 %539, %v251
        %v541 = vpop.permute.xlu0 %540
        %543 = vset.pattern.permute.xlu0 3
        %544 = vperm.xlu0 %543, %v252
        %v545 = vpop.permute.xlu0 %544
        %v547 = vlaneseq
        %v548 = vshrl.u32 %v547, 7
        %v549 = vsub.s32 3, %v548
        %v550 = vrot.slane %v253, %v549
        %v551 = vlaneseq
        %v552 = vshrl.u32 %v551, 7
        %v553 = vsub.s32 7, %v552
        %v554 = vrot.slane %v253, %v553
        %v555 = vlaneseq
        %v556 = vshrl.u32 %v555, 7
        %v557 = vsub.s32 3, %v556
        %v558 = vrot.slane %v254, %v557
        %v559 = vlaneseq
        %v560 = vshrl.u32 %v559, 7
        %v561 = vsub.s32 7, %v560
        %v562 = vrot.slane %v254, %v561
        %v563 = vlaneseq
        %v564 = vshrl.u32 %v563, 7
        %v565 = vsub.s32 3, %v564
        %v566 = vrot.slane %v255, %v565
        %v567 = vlaneseq
        %v568 = vshrl.u32 %v567, 7
        %v569 = vsub.s32 7, %v568
        %v570 = vrot.slane %v255, %v569
        %v571 = vlaneseq
        %v572 = vshrl.u32 %v571, 7
        %v573 = vsub.s32 3, %v572
        %v574 = vrot.slane %v256, %v573
        %v575 = vlaneseq
        %v576 = vshrl.u32 %v575, 7
        %v577 = vsub.s32 7, %v576
        %v578 = vrot.slane %v256, %v577
        %v587 = vlaneseq
        %v588 = vshrl.u32 %v587, 7
        %v589 = vsub.s32 3, %v588
        %v590 = vrot.slane %v550, %v589
        %v591 = vlaneseq
        %v592 = vshrl.u32 %v591, 7
        %v593 = vsub.s32 3, %v592
        %v594 = vrot.slane %v554, %v593
        %v595 = vlaneseq
        %v596 = vshrl.u32 %v595, 7
        %v597 = vsub.s32 3, %v596
        %v598 = vrot.slane %v558, %v597
        %v599 = vlaneseq
        %v600 = vshrl.u32 %v599, 7
        %v601 = vsub.s32 3, %v600
        %v602 = vrot.slane %v562, %v601
        %v603 = vlaneseq
        %v604 = vshrl.u32 %v603, 7
        %v605 = vsub.s32 3, %v604
        %v606 = vrot.slane %v566, %v605
        %v607 = vlaneseq
        %v608 = vshrl.u32 %v607, 7
        %v609 = vsub.s32 3, %v608
        %v610 = vrot.slane %v570, %v609
        %v611 = vlaneseq
        %v612 = vshrl.u32 %v611, 7
        %v613 = vsub.s32 3, %v612
        %v614 = vrot.slane %v574, %v613
        %v615 = vlaneseq
        %v616 = vshrl.u32 %v615, 7
        %v617 = vsub.s32 3, %v616
        %v618 = vrot.slane %v578, %v617
        %v619 = vmin.f32 %v541, %v590
        %v620 = vmin.f32 %v541, %v594
        %v621 = vmin.f32 %v541, %v598
        %v622 = vmin.f32 %v541, %v602
        %v623 = vmin.f32 %v541, %v606
        %v624 = vmin.f32 %v541, %v610
        %v625 = vmin.f32 %v541, %v614
        %v626 = vmin.f32 %v541, %v618
        %v627 = vmin.f32 %v545, %v590
        %v628 = vmin.f32 %v545, %v594
        %v629 = vmin.f32 %v545, %v598
        %v630 = vmin.f32 %v545, %v602
        %v631 = vmin.f32 %v545, %v606
        %v632 = vmin.f32 %v545, %v610
        %v633 = vmin.f32 %v545, %v614
        %v634 = vmin.f32 %v545, %v618
        %635 = vset.pattern.permute.xlu0 1
        %636 = vperm.xlu0 %635, %v251
        %v637 = vpop.permute.xlu0 %636
        %639 = vset.pattern.permute.xlu0 1
        %640 = vperm.xlu0 %639, %v252
        %v641 = vpop.permute.xlu0 %640
        %v643 = vlaneseq
        %v644 = vshrl.u32 %v643, 7
        %v645 = vsub.s32 1, %v644
        %v646 = vrot.slane %v253, %v645
        %v647 = vlaneseq
        %v648 = vshrl.u32 %v647, 7
        %v649 = vsub.s32 5, %v648
        %v650 = vrot.slane %v253, %v649
        %v651 = vlaneseq
        %v652 = vshrl.u32 %v651, 7
        %v653 = vsub.s32 1, %v652
        %v654 = vrot.slane %v254, %v653
        %v655 = vlaneseq
        %v656 = vshrl.u32 %v655, 7
        %v657 = vsub.s32 5, %v656
        %v658 = vrot.slane %v254, %v657
        %v659 = vlaneseq
        %v660 = vshrl.u32 %v659, 7
        %v661 = vsub.s32 1, %v660
        %v662 = vrot.slane %v255, %v661
        %v663 = vlaneseq
        %v664 = vshrl.u32 %v663, 7
        %v665 = vsub.s32 5, %v664
        %v666 = vrot.slane %v255, %v665
        %v667 = vlaneseq
        %v668 = vshrl.u32 %v667, 7
        %v669 = vsub.s32 1, %v668
        %v670 = vrot.slane %v256, %v669
        %v671 = vlaneseq
        %v672 = vshrl.u32 %v671, 7
        %v673 = vsub.s32 5, %v672
        %v674 = vrot.slane %v256, %v673
        %v683 = vlaneseq
        %v684 = vshrl.u32 %v683, 7
        %v685 = vsub.s32 1, %v684
        %v686 = vrot.slane %v646, %v685
        %v687 = vlaneseq
        %v688 = vshrl.u32 %v687, 7
        %v689 = vsub.s32 1, %v688
        %v690 = vrot.slane %v650, %v689
        %v691 = vlaneseq
        %v692 = vshrl.u32 %v691, 7
        %v693 = vsub.s32 1, %v692
        %v694 = vrot.slane %v654, %v693
        %v695 = vlaneseq
        %v696 = vshrl.u32 %v695, 7
        %v697 = vsub.s32 1, %v696
        %v698 = vrot.slane %v658, %v697
        %v699 = vlaneseq
        %v700 = vshrl.u32 %v699, 7
        %v701 = vsub.s32 1, %v700
        %v702 = vrot.slane %v662, %v701
        %v703 = vlaneseq
        %v704 = vshrl.u32 %v703, 7
        %v705 = vsub.s32 1, %v704
        %v706 = vrot.slane %v666, %v705
        %v707 = vlaneseq
        %v708 = vshrl.u32 %v707, 7
        %v709 = vsub.s32 1, %v708
        %v710 = vrot.slane %v670, %v709
        %v711 = vlaneseq
        %v712 = vshrl.u32 %v711, 7
        %v713 = vsub.s32 1, %v712
        %v714 = vrot.slane %v674, %v713
        %v715 = vmax.f32 %v637, %v686
        %v716 = vmax.f32 %v637, %v690
        %v717 = vmax.f32 %v637, %v694
        %v718 = vmax.f32 %v637, %v698
        %v719 = vmax.f32 %v637, %v702
        %v720 = vmax.f32 %v637, %v706
        %v721 = vmax.f32 %v637, %v710
        %v722 = vmax.f32 %v637, %v714
        %v723 = vmax.f32 %v641, %v686
        %v724 = vmax.f32 %v641, %v690
        %v725 = vmax.f32 %v641, %v694
        %v726 = vmax.f32 %v641, %v698
        %v727 = vmax.f32 %v641, %v702
        %v728 = vmax.f32 %v641, %v706
        %v729 = vmax.f32 %v641, %v710
        %v730 = vmax.f32 %v641, %v714
        %v731 = vsub.f32 %v619, %v715
        %v732 = vsub.f32 %v620, %v716
        %v733 = vsub.f32 %v621, %v717
        %v734 = vsub.f32 %v622, %v718
        %v735 = vsub.f32 %v623, %v719
        %v736 = vsub.f32 %v624, %v720
        %v737 = vsub.f32 %v625, %v721
        %v738 = vsub.f32 %v626, %v722
        %v739 = vsub.f32 %v627, %v723
        %v740 = vsub.f32 %v628, %v724
        %v741 = vsub.f32 %v629, %v725
        %v742 = vsub.f32 %v630, %v726
        %v743 = vsub.f32 %v631, %v727
        %v744 = vsub.f32 %v632, %v728
        %v745 = vsub.f32 %v633, %v729
        %v746 = vsub.f32 %v634, %v730
        %v747 = vmax.f32 %v731, 0.0
        %v748 = vmax.f32 %v732, 0.0
        %v749 = vmax.f32 %v733, 0.0
        %v750 = vmax.f32 %v734, 0.0
        %v751 = vmax.f32 %v735, 0.0
        %v752 = vmax.f32 %v736, 0.0
        %v753 = vmax.f32 %v737, 0.0
        %v754 = vmax.f32 %v738, 0.0
        %v755 = vmax.f32 %v739, 0.0
        %v756 = vmax.f32 %v740, 0.0
        %v757 = vmax.f32 %v741, 0.0
        %v758 = vmax.f32 %v742, 0.0
        %v759 = vmax.f32 %v743, 0.0
        %v760 = vmax.f32 %v744, 0.0
        %v761 = vmax.f32 %v745, 0.0
        %v762 = vmax.f32 %v746, 0.0
        %v763 = vmul.f32 %v523, %v747
        %v764 = vmul.f32 %v524, %v748
        %v765 = vmul.f32 %v525, %v749
        %v766 = vmul.f32 %v526, %v750
        %v767 = vmul.f32 %v527, %v751
        %v768 = vmul.f32 %v528, %v752
        %v769 = vmul.f32 %v529, %v753
        %v770 = vmul.f32 %v530, %v754
        %v771 = vmul.f32 %v531, %v755
        %v772 = vmul.f32 %v532, %v756
        %v773 = vmul.f32 %v533, %v757
        %v774 = vmul.f32 %v534, %v758
        %v775 = vmul.f32 %v535, %v759
        %v776 = vmul.f32 %v536, %v760
        %v777 = vmul.f32 %v537, %v761
        %v778 = vmul.f32 %v538, %v762
        %780 = vset.pattern.permute.xlu0 2
        %781 = vperm.xlu0 %780, %v277
        %v782 = vpop.permute.xlu0 %781
        %785 = vset.pattern.permute.xlu0 2
        %786 = vperm.xlu0 %785, %v278
        %v787 = vpop.permute.xlu0 %786
        %v793 = vlaneseq
        %v794 = vshrl.u32 %v793, 7
        %v795 = vsub.s32 2, %v794
        %v796 = vrot.slane %v311, %v795
        %v797 = vlaneseq
        %v798 = vshrl.u32 %v797, 7
        %v799 = vsub.s32 6, %v798
        %v800 = vrot.slane %v311, %v799
        %v801 = vlaneseq
        %v802 = vshrl.u32 %v801, 7
        %v803 = vsub.s32 2, %v802
        %v804 = vrot.slane %v312, %v803
        %v805 = vlaneseq
        %v806 = vshrl.u32 %v805, 7
        %v807 = vsub.s32 6, %v806
        %v808 = vrot.slane %v312, %v807
        %v809 = vlaneseq
        %v810 = vshrl.u32 %v809, 7
        %v811 = vsub.s32 2, %v810
        %v812 = vrot.slane %v313, %v811
        %v813 = vlaneseq
        %v814 = vshrl.u32 %v813, 7
        %v815 = vsub.s32 6, %v814
        %v816 = vrot.slane %v313, %v815
        %v817 = vlaneseq
        %v818 = vshrl.u32 %v817, 7
        %v819 = vsub.s32 2, %v818
        %v820 = vrot.slane %v314, %v819
        %v821 = vlaneseq
        %v822 = vshrl.u32 %v821, 7
        %v823 = vsub.s32 6, %v822
        %v824 = vrot.slane %v314, %v823
        %v833 = vlaneseq
        %v834 = vshrl.u32 %v833, 7
        %v835 = vsub.s32 2, %v834
        %v836 = vrot.slane %v796, %v835
        %v837 = vlaneseq
        %v838 = vshrl.u32 %v837, 7
        %v839 = vsub.s32 2, %v838
        %v840 = vrot.slane %v800, %v839
        %v841 = vlaneseq
        %v842 = vshrl.u32 %v841, 7
        %v843 = vsub.s32 2, %v842
        %v844 = vrot.slane %v804, %v843
        %v845 = vlaneseq
        %v846 = vshrl.u32 %v845, 7
        %v847 = vsub.s32 2, %v846
        %v848 = vrot.slane %v808, %v847
        %v849 = vlaneseq
        %v850 = vshrl.u32 %v849, 7
        %v851 = vsub.s32 2, %v850
        %v852 = vrot.slane %v812, %v851
        %v853 = vlaneseq
        %v854 = vshrl.u32 %v853, 7
        %v855 = vsub.s32 2, %v854
        %v856 = vrot.slane %v816, %v855
        %v857 = vlaneseq
        %v858 = vshrl.u32 %v857, 7
        %v859 = vsub.s32 2, %v858
        %v860 = vrot.slane %v820, %v859
        %v861 = vlaneseq
        %v862 = vshrl.u32 %v861, 7
        %v863 = vsub.s32 2, %v862
        %v864 = vrot.slane %v824, %v863
        %v865 = vadd.f32 %v782, %v836
        %v866 = vadd.f32 %v782, %v840
        %v867 = vadd.f32 %v782, %v844
        %v868 = vadd.f32 %v782, %v848
        %v869 = vadd.f32 %v782, %v852
        %v870 = vadd.f32 %v782, %v856
        %v871 = vadd.f32 %v782, %v860
        %v872 = vadd.f32 %v782, %v864
        %v873 = vadd.f32 %v787, %v836
        %v874 = vadd.f32 %v787, %v840
        %v875 = vadd.f32 %v787, %v844
        %v876 = vadd.f32 %v787, %v848
        %v877 = vadd.f32 %v787, %v852
        %v878 = vadd.f32 %v787, %v856
        %v879 = vadd.f32 %v787, %v860
        %v880 = vadd.f32 %v787, %v864
        %v881 = vsub.f32 %v865, %v763
        %v882 = vsub.f32 %v866, %v764
        %v883 = vsub.f32 %v867, %v765
        %v884 = vsub.f32 %v868, %v766
        %v885 = vsub.f32 %v869, %v767
        %v886 = vsub.f32 %v870, %v768
        %v887 = vsub.f32 %v871, %v769
        %v888 = vsub.f32 %v872, %v770
        %v889 = vsub.f32 %v873, %v771
        %v890 = vsub.f32 %v874, %v772
        %v891 = vsub.f32 %v875, %v773
        %v892 = vsub.f32 %v876, %v774
        %v893 = vsub.f32 %v877, %v775
        %v894 = vsub.f32 %v878, %v776
        %v895 = vsub.f32 %v879, %v777
        %v896 = vsub.f32 %v880, %v778
        %v897 = vmax.f32 %v881, 1e-12
        %v898 = vmax.f32 %v882, 1e-12
        %v899 = vmax.f32 %v883, 1e-12
        %v900 = vmax.f32 %v884, 1e-12
        %v901 = vmax.f32 %v885, 1e-12
        %v902 = vmax.f32 %v886, 1e-12
        %v903 = vmax.f32 %v887, 1e-12
        %v904 = vmax.f32 %v888, 1e-12
        %v905 = vmax.f32 %v889, 1e-12
        %v906 = vmax.f32 %v890, 1e-12
        %v907 = vmax.f32 %v891, 1e-12
        %v908 = vmax.f32 %v892, 1e-12
        %v909 = vmax.f32 %v893, 1e-12
        %v910 = vmax.f32 %v894, 1e-12
        %v911 = vmax.f32 %v895, 1e-12
        %v912 = vmax.f32 %v896, 1e-12
        %v913 = vrcp.pop %v897
        %v914 = vmul.f32 %v763, %v913
        %v915 = vrcp.pop %v898
        %v916 = vmul.f32 %v764, %v915
        %v917 = vrcp.pop %v899
        %v918 = vmul.f32 %v765, %v917
        %v919 = vrcp.pop %v900
        %v920 = vmul.f32 %v766, %v919
        %v921 = vrcp.pop %v901
        %v922 = vmul.f32 %v767, %v921
        %v923 = vrcp.pop %v902
        %v924 = vmul.f32 %v768, %v923
        %v925 = vrcp.pop %v903
        %v926 = vmul.f32 %v769, %v925
        %v927 = vrcp.pop %v904
        %v928 = vmul.f32 %v770, %v927
        %v929 = vrcp.pop %v905
        %v930 = vmul.f32 %v771, %v929
        %v931 = vrcp.pop %v906
        %v932 = vmul.f32 %v772, %v931
        %v933 = vrcp.pop %v907
        %v934 = vmul.f32 %v773, %v933
        %v935 = vrcp.pop %v908
        %v936 = vmul.f32 %v774, %v935
        %v937 = vrcp.pop %v909
        %v938 = vmul.f32 %v775, %v937
        %v939 = vrcp.pop %v910
        %v940 = vmul.f32 %v776, %v939
        %v941 = vrcp.pop %v911
        %v942 = vmul.f32 %v777, %v941
        %v943 = vrcp.pop %v912
        %v944 = vmul.f32 %v778, %v943
        %v945 = vpack.c.bf16 %v930, %v914
        %v946 = vpack.c.bf16 %v932, %v916
        %v947 = vpack.c.bf16 %v934, %v918
        %v948 = vpack.c.bf16 %v936, %v920
        %v949 = vpack.c.bf16 %v938, %v922
        %v950 = vpack.c.bf16 %v940, %v924
        %v951 = vpack.c.bf16 %v942, %v926
        %v952 = vpack.c.bf16 %v944, %v928
        %v961 = vunpack.c.l.b16 %v945
        %v962 = vunpack.c.l.b16 %v946
        %v963 = vunpack.c.l.b16 %v947
        %v964 = vunpack.c.l.b16 %v948
        %v965 = vunpack.c.l.b16 %v949
        %v966 = vunpack.c.l.b16 %v950
        %v967 = vunpack.c.l.b16 %v951
        %v968 = vunpack.c.l.b16 %v952
        %v969 = vunpack.c.h.b16 %v945
        %v970 = vunpack.c.h.b16 %v946
        %v971 = vunpack.c.h.b16 %v947
        %v972 = vunpack.c.h.b16 %v948
        %v973 = vunpack.c.h.b16 %v949
        %v974 = vunpack.c.h.b16 %v950
        %v975 = vunpack.c.h.b16 %v951
        %v976 = vunpack.c.h.b16 %v952
        %v977 = vpack.c.b16 %v962, %v961
        %v978 = vpack.c.b16 %v964, %v963
        %v979 = vpack.c.b16 %v966, %v965
        %v980 = vpack.c.b16 %v968, %v967
        %v981 = vpack.c.b16 %v970, %v969
        %v982 = vpack.c.b16 %v972, %v971
        %v983 = vpack.c.b16 %v974, %v973
        %v984 = vpack.c.b16 %v976, %v975
        %993 = vst [vmem:[%s222] sm:$0xff] %v977
        %994 = vst [vmem:[%s222 + $0x8] sm:$0xff] %v978
        %995 = vst [vmem:[%s222 + $0x10] sm:$0xff] %v979
        %996 = vst [vmem:[%s222 + $0x18] sm:$0xff] %v980
        %997 = vst [vmem:[%s222 + $0x20] sm:$0xff] %v981
        %998 = vst [vmem:[%s222 + $0x28] sm:$0xff] %v982
        %999 = vst [vmem:[%s222 + $0x30] sm:$0xff] %v983
        %1000 = vst [vmem:[%s222 + $0x38] sm:$0xff] %v984
        %v1001 = vmax.f32 %v914, %v930
        %v1002 = vrot.slane %v1001, 4
        %v1003 = vmax.f32 %v1001, %v1002
        %v1004 = vrot.slane %v1003, 2
        %v1005 = vmax.f32 %v1003, %v1004
        %v1006 = vrot.slane %v1005, 1
        %v1007 = vmax.f32 %v1005, %v1006
        %v1008 = vmax.f32 %v916, %v932
        %v1009 = vrot.slane %v1008, 4
        %v1010 = vmax.f32 %v1008, %v1009
        %v1011 = vrot.slane %v1010, 2
        %v1012 = vmax.f32 %v1010, %v1011
        %v1013 = vrot.slane %v1012, 1
        %v1014 = vmax.f32 %v1012, %v1013
        %v1015 = vmax.f32 %v918, %v934
        %v1016 = vrot.slane %v1015, 4
        %v1017 = vmax.f32 %v1015, %v1016
        %v1018 = vrot.slane %v1017, 2
        %v1019 = vmax.f32 %v1017, %v1018
        %v1020 = vrot.slane %v1019, 1
        %v1021 = vmax.f32 %v1019, %v1020
        %v1022 = vmax.f32 %v920, %v936
        %v1023 = vrot.slane %v1022, 4
        %v1024 = vmax.f32 %v1022, %v1023
        %v1025 = vrot.slane %v1024, 2
        %v1026 = vmax.f32 %v1024, %v1025
        %v1027 = vrot.slane %v1026, 1
        %v1028 = vmax.f32 %v1026, %v1027
        %v1029 = vmax.f32 %v922, %v938
        %v1030 = vrot.slane %v1029, 4
        %v1031 = vmax.f32 %v1029, %v1030
        %v1032 = vrot.slane %v1031, 2
        %v1033 = vmax.f32 %v1031, %v1032
        %v1034 = vrot.slane %v1033, 1
        %v1035 = vmax.f32 %v1033, %v1034
        %v1036 = vmax.f32 %v924, %v940
        %v1037 = vrot.slane %v1036, 4
        %v1038 = vmax.f32 %v1036, %v1037
        %v1039 = vrot.slane %v1038, 2
        %v1040 = vmax.f32 %v1038, %v1039
        %v1041 = vrot.slane %v1040, 1
        %v1042 = vmax.f32 %v1040, %v1041
        %v1043 = vmax.f32 %v926, %v942
        %v1044 = vrot.slane %v1043, 4
        %v1045 = vmax.f32 %v1043, %v1044
        %v1046 = vrot.slane %v1045, 2
        %v1047 = vmax.f32 %v1045, %v1046
        %v1048 = vrot.slane %v1047, 1
        %v1049 = vmax.f32 %v1047, %v1048
        %v1050 = vmax.f32 %v928, %v944
        %v1051 = vrot.slane %v1050, 4
        %v1052 = vmax.f32 %v1050, %v1051
        %v1053 = vrot.slane %v1052, 2
        %v1054 = vmax.f32 %v1052, %v1053
        %v1055 = vrot.slane %v1054, 1
        %v1056 = vmax.f32 %v1054, %v1055
        %vm1057 = vcmp.ge.f32.partialorder %v1007, 0.5
        %vm1058 = vcmp.ge.f32.partialorder %v1014, 0.5
        %vm1059 = vcmp.ge.f32.partialorder %v1021, 0.5
        %vm1060 = vcmp.ge.f32.partialorder %v1028, 0.5
        %vm1061 = vcmp.ge.f32.partialorder %v1035, 0.5
        %vm1062 = vcmp.ge.f32.partialorder %v1042, 0.5
        %vm1063 = vcmp.ge.f32.partialorder %v1049, 0.5
        %vm1064 = vcmp.ge.f32.partialorder %v1056, 0.5
        %v1065 = vsel %vm1057, 1, 0
        %v1066 = vsel %vm1058, 1, 0
        %v1067 = vsel %vm1059, 1, 0
        %v1068 = vsel %vm1060, 1, 0
        %v1069 = vsel %vm1061, 1, 0
        %v1070 = vsel %vm1062, 1, 0
        %v1071 = vsel %vm1063, 1, 0
        %v1072 = vsel %vm1064, 1, 0
        %v1073 = vlaneseq
        %v1074 = vshrl.u32 %v1073, 7
        %v1075 = vadd.s32 %v1074, 8
        %v1076 = vmul.u32 %v1074, 256
        %v1077 = vmul.u32 %v1075, 256
        %1078 = vset.pattern.permute.xlu0 4
        %1079 = vperm.xlu0 %1078, %v257
        %v1080 = vpop.permute.xlu0 %1079
        %1081 = vset.pattern.permute.xlu0 4
        %1082 = vperm.xlu0 %1081, %v258
        %v1083 = vpop.permute.xlu0 %1082
        %v1084 = vadd.s32 %v1076, %v1080
        %v1085 = vadd.s32 %v1077, %v1083
        %vm1086 = vcmp.eq.f32.partialorder %v914, %v1007
        %vm1087 = vcmp.eq.f32.partialorder %v916, %v1014
        %vm1088 = vcmp.eq.f32.partialorder %v918, %v1021
        %vm1089 = vcmp.eq.f32.partialorder %v920, %v1028
        %vm1090 = vcmp.eq.f32.partialorder %v922, %v1035
        %vm1091 = vcmp.eq.f32.partialorder %v924, %v1042
        %vm1092 = vcmp.eq.f32.partialorder %v926, %v1049
        %vm1093 = vcmp.eq.f32.partialorder %v928, %v1056
        %vm1094 = vcmp.eq.f32.partialorder %v930, %v1007
        %vm1095 = vcmp.eq.f32.partialorder %v932, %v1014
        %vm1096 = vcmp.eq.f32.partialorder %v934, %v1021
        %vm1097 = vcmp.eq.f32.partialorder %v936, %v1028
        %vm1098 = vcmp.eq.f32.partialorder %v938, %v1035
        %vm1099 = vcmp.eq.f32.partialorder %v940, %v1042
        %vm1100 = vcmp.eq.f32.partialorder %v942, %v1049
        %vm1101 = vcmp.eq.f32.partialorder %v944, %v1056
        %v1102 = vsel %vm1086, %v1084, 2147483647
        %v1103 = vsel %vm1087, %v1084, 2147483647
        %v1104 = vsel %vm1088, %v1084, 2147483647
        %v1105 = vsel %vm1089, %v1084, 2147483647
        %v1106 = vsel %vm1090, %v1084, 2147483647
        %v1107 = vsel %vm1091, %v1084, 2147483647
        %v1108 = vsel %vm1092, %v1084, 2147483647
        %v1109 = vsel %vm1093, %v1084, 2147483647
        %v1110 = vsel %vm1094, %v1085, 2147483647
        %v1111 = vsel %vm1095, %v1085, 2147483647
        %v1112 = vsel %vm1096, %v1085, 2147483647
        %v1113 = vsel %vm1097, %v1085, 2147483647
        %v1114 = vsel %vm1098, %v1085, 2147483647
        %v1115 = vsel %vm1099, %v1085, 2147483647
        %v1116 = vsel %vm1100, %v1085, 2147483647
        %v1117 = vsel %vm1101, %v1085, 2147483647
        %vm1118 = vcmp.lt.s32.totalorder %v1102, %v1110
        %v1119 = vsel %vm1118, %v1102, %v1110
        %v1120 = vrot.slane %v1119, 4
        %vm1121 = vcmp.lt.s32.totalorder %v1119, %v1120
        %v1122 = vsel %vm1121, %v1119, %v1120
        %v1123 = vrot.slane %v1122, 2
        %vm1124 = vcmp.lt.s32.totalorder %v1122, %v1123
        %v1125 = vsel %vm1124, %v1122, %v1123
        %v1126 = vrot.slane %v1125, 1
        %vm1127 = vcmp.lt.s32.totalorder %v1125, %v1126
        %v1128 = vsel %vm1127, %v1125, %v1126
        %vm1129 = vcmp.lt.s32.totalorder %v1103, %v1111
        %v1130 = vsel %vm1129, %v1103, %v1111
        %v1131 = vrot.slane %v1130, 4
        %vm1132 = vcmp.lt.s32.totalorder %v1130, %v1131
        %v1133 = vsel %vm1132, %v1130, %v1131
        %v1134 = vrot.slane %v1133, 2
        %vm1135 = vcmp.lt.s32.totalorder %v1133, %v1134
        %v1136 = vsel %vm1135, %v1133, %v1134
        %v1137 = vrot.slane %v1136, 1
        %vm1138 = vcmp.lt.s32.totalorder %v1136, %v1137
        %v1139 = vsel %vm1138, %v1136, %v1137
        %vm1140 = vcmp.lt.s32.totalorder %v1104, %v1112
        %v1141 = vsel %vm1140, %v1104, %v1112
        %v1142 = vrot.slane %v1141, 4
        %vm1143 = vcmp.lt.s32.totalorder %v1141, %v1142
        %v1144 = vsel %vm1143, %v1141, %v1142
        %v1145 = vrot.slane %v1144, 2
        %vm1146 = vcmp.lt.s32.totalorder %v1144, %v1145
        %v1147 = vsel %vm1146, %v1144, %v1145
        %v1148 = vrot.slane %v1147, 1
        %vm1149 = vcmp.lt.s32.totalorder %v1147, %v1148
        %v1150 = vsel %vm1149, %v1147, %v1148
        %vm1151 = vcmp.lt.s32.totalorder %v1105, %v1113
        %v1152 = vsel %vm1151, %v1105, %v1113
        %v1153 = vrot.slane %v1152, 4
        %vm1154 = vcmp.lt.s32.totalorder %v1152, %v1153
        %v1155 = vsel %vm1154, %v1152, %v1153
        %v1156 = vrot.slane %v1155, 2
        %vm1157 = vcmp.lt.s32.totalorder %v1155, %v1156
        %v1158 = vsel %vm1157, %v1155, %v1156
        %v1159 = vrot.slane %v1158, 1
        %vm1160 = vcmp.lt.s32.totalorder %v1158, %v1159
        %v1161 = vsel %vm1160, %v1158, %v1159
        %vm1162 = vcmp.lt.s32.totalorder %v1106, %v1114
        %v1163 = vsel %vm1162, %v1106, %v1114
        %v1164 = vrot.slane %v1163, 4
        %vm1165 = vcmp.lt.s32.totalorder %v1163, %v1164
        %v1166 = vsel %vm1165, %v1163, %v1164
        %v1167 = vrot.slane %v1166, 2
        %vm1168 = vcmp.lt.s32.totalorder %v1166, %v1167
        %v1169 = vsel %vm1168, %v1166, %v1167
        %v1170 = vrot.slane %v1169, 1
        %vm1171 = vcmp.lt.s32.totalorder %v1169, %v1170
        %v1172 = vsel %vm1171, %v1169, %v1170
        %vm1173 = vcmp.lt.s32.totalorder %v1107, %v1115
        %v1174 = vsel %vm1173, %v1107, %v1115
        %v1175 = vrot.slane %v1174, 4
        %vm1176 = vcmp.lt.s32.totalorder %v1174, %v1175
        %v1177 = vsel %vm1176, %v1174, %v1175
        %v1178 = vrot.slane %v1177, 2
        %vm1179 = vcmp.lt.s32.totalorder %v1177, %v1178
        %v1180 = vsel %vm1179, %v1177, %v1178
        %v1181 = vrot.slane %v1180, 1
        %vm1182 = vcmp.lt.s32.totalorder %v1180, %v1181
        %v1183 = vsel %vm1182, %v1180, %v1181
        %vm1184 = vcmp.lt.s32.totalorder %v1108, %v1116
        %v1185 = vsel %vm1184, %v1108, %v1116
        %v1186 = vrot.slane %v1185, 4
        %vm1187 = vcmp.lt.s32.totalorder %v1185, %v1186
        %v1188 = vsel %vm1187, %v1185, %v1186
        %v1189 = vrot.slane %v1188, 2
        %vm1190 = vcmp.lt.s32.totalorder %v1188, %v1189
        %v1191 = vsel %vm1190, %v1188, %v1189
        %v1192 = vrot.slane %v1191, 1
        %vm1193 = vcmp.lt.s32.totalorder %v1191, %v1192
        %v1194 = vsel %vm1193, %v1191, %v1192
        %vm1195 = vcmp.lt.s32.totalorder %v1109, %v1117
        %v1196 = vsel %vm1195, %v1109, %v1117
        %v1197 = vrot.slane %v1196, 4
        %vm1198 = vcmp.lt.s32.totalorder %v1196, %v1197
        %v1199 = vsel %vm1198, %v1196, %v1197
        %v1200 = vrot.slane %v1199, 2
        %vm1201 = vcmp.lt.s32.totalorder %v1199, %v1200
        %v1202 = vsel %vm1201, %v1199, %v1200
        %v1203 = vrot.slane %v1202, 1
        %vm1204 = vcmp.lt.s32.totalorder %v1202, %v1203
        %v1205 = vsel %vm1204, %v1202, %v1203
        %v1206 = vshra.s32 %v1128, 8
        %v1207 = vshra.s32 %v1139, 8
        %v1208 = vshra.s32 %v1150, 8
        %v1209 = vshra.s32 %v1161, 8
        %v1210 = vshra.s32 %v1172, 8
        %v1211 = vshra.s32 %v1183, 8
        %v1212 = vshra.s32 %v1194, 8
        %v1213 = vshra.s32 %v1205, 8
        %v1214 = vand.u32 %v1128, 255
        %v1215 = vand.u32 %v1139, 255
        %v1216 = vand.u32 %v1150, 255
        %v1217 = vand.u32 %v1161, 255
        %v1218 = vand.u32 %v1172, 255
        %v1219 = vand.u32 %v1183, 255
        %v1220 = vand.u32 %v1194, 255
        %v1221 = vand.u32 %v1205, 255
        %vm1222 = vcmp.eq.s32.totalorder %v1065, 0
        %vm1223 = vcmp.eq.s32.totalorder %v1066, 0
        %vm1224 = vcmp.eq.s32.totalorder %v1067, 0
        %vm1225 = vcmp.eq.s32.totalorder %v1068, 0
        %vm1226 = vcmp.eq.s32.totalorder %v1069, 0
        %vm1227 = vcmp.eq.s32.totalorder %v1070, 0
        %vm1228 = vcmp.eq.s32.totalorder %v1071, 0
        %vm1229 = vcmp.eq.s32.totalorder %v1072, 0
        %v1230 = vsel %vm1222, 80, %v1214
        %v1231 = vsel %vm1223, 80, %v1215
        %v1232 = vsel %vm1224, 80, %v1216
        %v1233 = vsel %vm1225, 80, %v1217
        %v1234 = vsel %vm1226, 80, %v1218
        %v1235 = vsel %vm1227, 80, %v1219
        %v1236 = vsel %vm1228, 80, %v1220
        %v1237 = vsel %vm1229, 80, %v1221
        %vm1238 = vcmp.eq.s32.totalorder %v1074, 0
        %vm1239 = vcmp.eq.s32.totalorder %v1074, 1
        %v1240 = vsel %vm1239, %v1065, %v1230
        %v1241 = vsel %vm1239, %v1066, %v1231
        %v1242 = vsel %vm1239, %v1067, %v1232
        %v1243 = vsel %vm1239, %v1068, %v1233
        %v1244 = vsel %vm1239, %v1069, %v1234
        %v1245 = vsel %vm1239, %v1070, %v1235
        %v1246 = vsel %vm1239, %v1071, %v1236
        %v1247 = vsel %vm1239, %v1072, %v1237
        %v1248 = vsel %vm1238, %v1206, %v1240
        %v1249 = vsel %vm1238, %v1207, %v1241
        %v1250 = vsel %vm1238, %v1208, %v1242
        %v1251 = vsel %vm1238, %v1209, %v1243
        %v1252 = vsel %vm1238, %v1210, %v1244
        %v1253 = vsel %vm1238, %v1211, %v1245
        %v1254 = vsel %vm1238, %v1212, %v1246
        %v1255 = vsel %vm1238, %v1213, %v1247
        %v1256 = vcombine.low %v1248, %v1249
        %v1257 = vcombine.low %v1250, %v1251
        %v1258 = vcombine.low %v1252, %v1253
        %v1259 = vcombine.low %v1254, %v1255
        %1260 = vst [vmem:[%s249] sm:$0x77] %v1256
        %1261 = vst [vmem:[%s249 + $0x8] sm:$0x77] %v1257
        %1262 = vst [vmem:[%s249 + $0x10] sm:$0x77] %v1258
        %1263 = vst [vmem:[%s249 + $0x18] sm:$0x77] %v1259
        %s1264 = sand.u32 %s97, 1
        %s1265 = scalar_lea.sflag [#allocation4], %s1264
        %s1266 = sand.u32 %s97, 1
        %s1267 = smul.addr %s1266, 64
        %s1268 = scalar_lea.vmem [#allocation5], %s1267
        %s1269 = smul.u32 8, %s26
        %p1270 = scmp.lt.s32.totalorder %s25, 1
        %s1271 = scalar_select %p1270, %s25, 1
        %p1272 = scmp.lt.s32.totalorder %s1269, 7
        %s1273 = scalar_select %p1272, %s1269, 7
        %s1274 = smul.addr %s1271, 8
        %s1275 = sadd.s32 %s1273, %s1274
        %s1276 = smul.addr %s1275, 4
        %s1277 = scalar_lea.vmem %s3, %s1276
        // Predicated region
        $region33: #{tpu_custom_call.1} parent=27 // pred_check
          %p1278 = pneg %p107
        $region34: #{tpu_custom_call.1} parent=27 // pred_check_branch
          %1280 = sbr.rel (%p1278) target = $region36
        $region35: #{tpu_custom_call.1} parent=27 // pred_region
          %s1281 = smul.u32 8, %s26
          %s1283 = ssub.s32 1024, 1024
          %1284 = vsyncadd %s1265, %s1283
          %s1285 = smul.addr %s25, 16
          %s1286 = sadd.s32 %s1281, %s1285
          %s1287 = smul.addr %s1286, 64
          %s1288 = scalar_lea.hbm %s2, %s1287
          %s1289 = sshll.u32 %s1268, 4
          %s1290 = int_to_ptr.vmem [resolvable:$true] %s1289
          %1295 = dma.vmem_to_hbm [thread:$0]  %s1290, 1024, %s1288, %s1265, 512, 512, 32
        $region36: #{tpu_custom_call.1} parent=27 // pred_fallthru
          _
        // Predicated region
        $region37: #{tpu_custom_call.1} parent=27 // pred_check
          %p1296 = pneg %p135
        $region38: #{tpu_custom_call.1} parent=27 // pred_check_branch
          %1298 = sbr.rel (%p1296) target = $region40
        $region39: #{tpu_custom_call.1} parent=27 // pred_region
          %s1299 = smul.u32 8, %s26
        $region40: #{tpu_custom_call.1} parent=27 // pred_fallthru
          _
      $region28: #{tpu_custom_call.1} parent=5 // pred_fallthru
        _
      %p1300 = scmp.le.s32.totalorder 2, %s16
      // Predicated region
      $region41: #{tpu_custom_call.1} parent=5 // pred_check
        %p1301 = pneg %p1300
      $region42: #{tpu_custom_call.1} parent=5 // pred_check_branch
        %1303 = sbr.rel (%p1301) target = $region44
      $region43: #{tpu_custom_call.1} parent=5 // pred_region
        %s1304 = ssub.s32 %s16, 2
        // Predicated region
        $region45: #{tpu_custom_call.1} parent=43 // pred_check
          %p1305 = pneg %p113
        $region46: #{tpu_custom_call.1} parent=43 // pred_check_branch
          %1307 = sbr.rel (%p1305) target = $region48
        $region47: #{tpu_custom_call.1} parent=43 // pred_region
          %s1308 = sand.u32 %s98, 1
          %s1309 = scalar_lea.sflag [#allocation4], %s1308
          %s1310 = sand.u32 %s98, 1
          %s1311 = smul.addr %s1310, 64
          %s1312 = scalar_lea.vmem [#allocation5], %s1311
          %1313 = dma.done %s1309, 1024
        $region48: #{tpu_custom_call.1} parent=43 // pred_fallthru
          _
        // Predicated region
        $region49: #{tpu_custom_call.1} parent=43 // pred_check
          %p1314 = pneg %p141
        $region50: #{tpu_custom_call.1} parent=43 // pred_check_branch
          %1316 = sbr.rel (%p1314) target = $region52
        $region51: #{tpu_custom_call.1} parent=43 // pred_region
          %s1317 = smul.u32 8, %s28
          %p1318 = scmp.lt.s32.totalorder %s27, 1
          %s1319 = scalar_select %p1318, %s27, 1
          %p1320 = scmp.lt.s32.totalorder %s1317, 7
          %s1321 = scalar_select %p1320, %s1317, 7
          %s1322 = smul.addr %s1319, 8
          %s1323 = sadd.s32 %s1321, %s1322
          %s1324 = smul.addr %s1323, 4
          %s1325 = scalar_lea.vmem %s3, %s1324
        $region52: #{tpu_custom_call.1} parent=43 // pred_fallthru
          _
      $region44: #{tpu_custom_call.1} parent=5 // pred_fallthru
        _
    $region6: #{tpu_custom_call.1} parent=1 // loop_footer
      %s20 = sadd.s32 1, %s16
    $region7: #{tpu_custom_call.1} parent=1 // loop_footer_branch
      %15 = sbr.rel target = $region3
    $region8: #{tpu_custom_call.1} parent=1 // loop_exit
      _
    %1326 = vsyncpa [#allocation3], 1
    %s1327 = scalar_lea.sflag [#allocation3], 1
    %1328 = vsyncpa %s1327, 1
    %1329 = vsyncpa [#allocation4], 1
    %s1330 = scalar_lea.sflag [#allocation4], 1
    %1331 = vsyncpa %s1330, 1

</llo_original>
